<compile_context>
chip_gen: v7x
topology: tpu7x:2x2x1
jax: 0.10.0
libtpu: 0.0.40
codegen_flags: <defaults>
</compile_context>

<pallas_src>
import functools

import jax
import jax.numpy as jnp
from jax.experimental import pallas as pl
from jax.experimental.pallas import tpu as pltpu

LANE = 128     # lane width: pad feature dims to a multiple of this
SUBLANE = 8    # sublane width: pad/ tile the batch dim to a multiple of this
MAX_TM = 256   # max batch-tile rows per grid step


def _round_up(n, m):
    return ((n + m - 1) // m) * m


def _pad2(a, rows, cols):
    """Zero-pad a 2-D array up to (rows, cols)."""
    r, c = a.shape
    return jnp.pad(a, ((0, rows - r), (0, cols - c)))


# --------------------------------------------------------------------------
# Kernel
# --------------------------------------------------------------------------
def _fused_mlp_kernel(n_ms, with_hidden,
                      x_ref, pre_w_ref, pre_b_ref, ms_w_ref, ms_b_ref,
                      post_w_ref, post_b_ref, *out_refs):
    """Whole pre -> ms[...] -> post chain on one M-tile.

    x_ref      : (TM, D_IN_P)        bf16   (batch tile, grid axis 0)
    pre_w_ref  : (D_IN_P, H_P)       bf16   pre_b_ref : (1, H_P)       f32
    ms_w_ref   : (N_MS, H_P, H_P)    bf16   ms_b_ref  : (N_MS, 1, H_P) f32
    post_w_ref : (H_P, D_OUT_P)      bf16   post_b_ref: (1, D_OUT_P)   f32
    out_ref    : (TM, D_OUT_P)       f32
    hidden_ref : (N_MS, TM, H_P)     bf16   (only when with_hidden)
    """
    if with_hidden:
        out_ref, hidden_ref = out_refs
    else:
        (out_ref,) = out_refs

    cdt = pre_w_ref.dtype  # MXU input dtype (bf16)

    # pre: bf16 matmul, f32 accumulation, f32 bias add.
    y = jnp.dot(x_ref[...], pre_w_ref[...],
                preferred_element_type=jnp.float32) + pre_b_ref[...]

    # ms chain — n_ms is a small Python int and all weights are VMEM-resident,
    # so a fully unrolled static loop keeps the MXU fed back-to-back.
    for i in range(n_ms):
        y_in = y.astype(cdt)
        if with_hidden:
            hidden_ref[i] = y_in.astype(hidden_ref.dtype)
        y = jnp.dot(y_in, ms_w_ref[i],
                    preferred_element_type=jnp.float32) + ms_b_ref[i]

    # post
    out_ref[...] = (jnp.dot(y.astype(cdt), post_w_ref[...],
                            preferred_element_type=jnp.float32)
                    + post_b_ref[...]).astype(out_ref.dtype)


def fused_forward(x_p, pre_w, pre_b, ms_w, ms_b, post_w, post_b, *,
                  n_ms, with_hidden, tm):
    """Single pallas_call for the full layer chain, gridded over M-tiles."""
    m_p, d_in_p = x_p.shape
    h_p = pre_w.shape[1]
    d_out_p = post_w.shape[1]
    vmem = pltpu.MemorySpace.VMEM
    param_spec = pl.BlockSpec(memory_space=vmem)   # full-array, VMEM-resident

    out_shapes = [jax.ShapeDtypeStruct((m_p, d_out_p), jnp.float32)]
    out_specs = [pl.BlockSpec((tm, d_out_p), lambda i: (i, 0))]
    if with_hidden:
        out_shapes.append(jax.ShapeDtypeStruct((n_ms, m_p, h_p), jnp.bfloat16))
        out_specs.append(pl.BlockSpec((n_ms, tm, h_p), lambda i: (0, i, 0)))

    # VMEM budget: resident params + double-buffered per-tile x/out/hidden.
    param_bytes = (pre_w.size + ms_w.size + post_w.size) * 2 \
                + (pre_b.size + ms_b.size + post_b.size) * 4
    tile_bytes = 2 * (tm * d_in_p * 2 + tm * d_out_p * 4
                      + (n_ms * tm * h_p * 2 if with_hidden else 0))
    vmem_limit = min(100 * 1024 * 1024,
                     max(32 * 1024 * 1024, 2 * (param_bytes + tile_bytes)))

    outs = pl.pallas_call(
        functools.partial(_fused_mlp_kernel, n_ms, with_hidden),
        out_shape=tuple(out_shapes),
        grid=(m_p // tm,),
        in_specs=[pl.BlockSpec((tm, d_in_p), lambda i: (i, 0))]
                 + [param_spec] * 6,
        out_specs=tuple(out_specs),
        compiler_params=pltpu.CompilerParams(
            dimension_semantics=("parallel",),
            vmem_limit_bytes=vmem_limit),
    )(x_p, pre_w, pre_b, ms_w, ms_b, post_w, post_b)
    return outs


# --------------------------------------------------------------------------
# Jitted wrapper (pad -> kernel -> slice) so host dispatch / pad / slice fuse.
# --------------------------------------------------------------------------
@functools.partial(jax.jit, static_argnames=("cfg", "with_hidden"))
def _jit_forward(x, params, cfg, with_hidden):
    d_in, hidden, d_out, n_ms, d_in_p, h_p, d_out_p = cfg
    pre_w, pre_b, ms_w, ms_b, post_w, post_b = params

    m = x.shape[0]
    m_p = _round_up(max(m, SUBLANE), SUBLANE)
    tm = m_p if m_p <= MAX_TM else MAX_TM
    m_p = _round_up(m_p, tm)

    x_p = jnp.pad(x, ((0, m_p - m), (0, d_in_p - d_in))).astype(jnp.bfloat16)
    outs = fused_forward(x_p, pre_w, pre_b, ms_w, ms_b, post_w, post_b,
                         n_ms=n_ms, with_hidden=with_hidden, tm=tm)
    out = outs[0][:m, :d_out]
    if with_hidden:
        hid_p = outs[1]
        return out, tuple(hid_p[i, :m, :hidden] for i in range(n_ms))
    return out


# --------------------------------------------------------------------------
# Model
# --------------------------------------------------------------------------
def init_linear_params(key, in_features, out_features):
    """torch.nn.Linear-style init (uniform +/- 1/sqrt(fan_in)).

    Weight stored transposed to (in, out) so the kernel matmul is lane-dense
    on the output feature axis.
    """
    kw, kb = jax.random.split(key)
    bound = 1.0 / jnp.sqrt(jnp.asarray(in_features, jnp.float32))
    w = jax.random.uniform(kw, (in_features, out_features), jnp.float32,
                           minval=-bound, maxval=bound)
    b = jax.random.uniform(kb, (1, out_features), jnp.float32,
                           minval=-bound, maxval=bound)
    return w, b


class ModelNormalPallas:
    """Pallas equivalent of Model_NORMAL with Linear pre / ms / post."""

    def __init__(self, key, d_in, hidden, d_out, n_ms):
        assert n_ms >= 1
        self.d_in, self.hidden, self.d_out, self.n_ms = d_in, hidden, d_out, n_ms
        self.d_in_p = _round_up(d_in, LANE)
        self.hidden_p = _round_up(hidden, LANE)
        self.d_out_p = _round_up(d_out, LANE)

        keys = jax.random.split(key, n_ms + 2)
        pre_w, pre_b = init_linear_params(keys[0], d_in, hidden)
        ms = [init_linear_params(keys[1 + i], hidden, hidden) for i in range(n_ms)]
        post_w, post_b = init_linear_params(keys[-1], hidden, d_out)

        # Weights in bf16 (MXU-native), biases in f32. Keep unpadded copies
        # for the pure-JAX reference (same arithmetic path as the kernel).
        self._raw = (pre_w.astype(jnp.bfloat16), pre_b,
                     [(w.astype(jnp.bfloat16), b) for w, b in ms],
                     post_w.astype(jnp.bfloat16), post_b)

        # Zero-pad every feature axis to a multiple of 128 (lane-dense, exact).
        self.params = (
            _pad2(pre_w, self.d_in_p, self.hidden_p).astype(jnp.bfloat16),
            _pad2(pre_b, 1, self.hidden_p),
            jnp.stack([_pad2(w, self.hidden_p, self.hidden_p)
                       for w, _ in ms]).astype(jnp.bfloat16),
            jnp.stack([_pad2(b, 1, self.hidden_p) for _, b in ms]),
            _pad2(post_w, self.hidden_p, self.d_out_p).astype(jnp.bfloat16),
            _pad2(post_b, 1, self.d_out_p),
        )
        self._cfg = (d_in, hidden, d_out, n_ms,
                     self.d_in_p, self.hidden_p, self.d_out_p)

    def __call__(self, x, return_hidden_states=False):
        if return_hidden_states:
            out, hidden = _jit_forward(x, self.params, self._cfg, True)
            return out, list(hidden)
        return _jit_forward(x, self.params, self._cfg, False)

    def reference(self, x):
        """Pure-JAX reference using the same bf16/f32-accum arithmetic."""
        pre_w, pre_b, ms, post_w, post_b = self._raw
        y = jnp.dot(x.astype(jnp.bfloat16), pre_w,
                    preferred_element_type=jnp.float32) + pre_b
        hidden = []
        for w, b in ms:
            yb = y.astype(jnp.bfloat16)
            hidden.append(yb)
            y = jnp.dot(yb, w, preferred_element_type=jnp.float32) + b
        out = jnp.dot(y.astype(jnp.bfloat16), post_w,
                      preferred_element_type=jnp.float32) + post_b
        return out, hidden


if __name__ == "__main__":
    B, D_IN, HIDDEN, D_OUT, N_MS = 8, 32, 64, 32, 3

    key = jax.random.PRNGKey(0)
    k_model, k_x = jax.random.split(key)

    model = ModelNormalPallas(k_model, D_IN, HIDDEN, D_OUT, N_MS)
    x = jax.random.normal(k_x, (B, D_IN), jnp.float32)

    # Main path: one forward pass returning hidden states.
    out, hidden = model(x, return_hidden_states=True)
    jax.block_until_ready(out)
    for h in hidden:
        jax.block_until_ready(h)

    # Also exercise the (cheaper) no-hidden kernel variant once.
    out_nh = model(x)
    jax.block_until_ready(out_nh)

    # Correctness vs pure-JAX reference (identical bf16/f32-accum path).
    ref_out, ref_hidden = model.reference(x)
    assert out.shape == (B, D_OUT)
    assert out_nh.shape == (B, D_OUT)
    assert len(hidden) == N_MS
    assert jnp.allclose(out, ref_out, atol=1e-2, rtol=1e-2)
    assert jnp.allclose(out_nh, ref_out, atol=1e-2, rtol=1e-2)
    for h, rh in zip(hidden, ref_hidden):
        assert h.shape == (B, HIDDEN)
        assert jnp.allclose(h.astype(jnp.float32), rh.astype(jnp.float32),
                            atol=1e-2, rtol=1e-2)

    print("KERNEL_OK")
</pallas_src>

<mosaic_0001>
module attributes {stable_mosaic.version = 11 : i64} {
  func.func @_fused_mlp_kernel(%arg0: i32, %arg1: memref<8x128xbf16, #tpu.memory_space<vmem>>, %arg2: memref<128x128xbf16, #tpu.memory_space<vmem>>, %arg3: memref<1x128xf32, #tpu.memory_space<vmem>>, %arg4: memref<3x128x128xbf16, #tpu.memory_space<vmem>>, %arg5: memref<3x1x128xf32, #tpu.memory_space<vmem>>, %arg6: memref<128x128xbf16, #tpu.memory_space<vmem>>, %arg7: memref<1x128xf32, #tpu.memory_space<vmem>>, %arg8: memref<8x128xf32, #tpu.memory_space<vmem>>, %arg9: memref<3x8x128xbf16, #tpu.memory_space<vmem>>) attributes {dimension_semantics = [#tpu.dimension_semantics<parallel>], iteration_bounds = array<i64: 1>, scalar_prefetch = 0 : i64, scratch_operands = 0 : i64, tpu.core_type = #tpu.core_type<tc>, window_params = [{transform_indices = @transform_0, window_bounds = array<i64: 8, 128>}, {pipeline_mode = #tpu.pipeline_mode<synchronous>, transform_indices = @transform_1, window_bounds = array<i64: 128, 128>}, {pipeline_mode = #tpu.pipeline_mode<synchronous>, transform_indices = @transform_2, window_bounds = array<i64: 1, 128>}, {pipeline_mode = #tpu.pipeline_mode<synchronous>, transform_indices = @transform_3, window_bounds = array<i64: 3, 128, 128>}, {pipeline_mode = #tpu.pipeline_mode<synchronous>, transform_indices = @transform_4, window_bounds = array<i64: 3, 1, 128>}, {pipeline_mode = #tpu.pipeline_mode<synchronous>, transform_indices = @transform_5, window_bounds = array<i64: 128, 128>}, {pipeline_mode = #tpu.pipeline_mode<synchronous>, transform_indices = @transform_6, window_bounds = array<i64: 1, 128>}, {transform_indices = @transform_7, window_bounds = array<i64: 8, 128>}, {transform_indices = @transform_8, window_bounds = array<i64: 3, 8, 128>}]} {
    %c0 = arith.constant 0 : index
    %c0_0 = arith.constant 0 : index
    %0 = vector.load %arg1[%c0, %c0_0] : memref<8x128xbf16, #tpu.memory_space<vmem>>, vector<8x128xbf16>
    %c0_1 = arith.constant 0 : index
    %c0_2 = arith.constant 0 : index
    %1 = vector.load %arg2[%c0_1, %c0_2] : memref<128x128xbf16, #tpu.memory_space<vmem>>, vector<128x128xbf16>
    %cst = arith.constant dense<0.000000e+00> : vector<8x128xf32>
    %2 = tpu.matmul %0, %1, %cst {dimension_numbers = #tpu.dot_dimension_numbers<[1], [0], [0], [1], [0, 0, 1, 1], [], []>} : vector<8x128xbf16>, vector<128x128xbf16>, vector<8x128xf32> -> vector<8x128xf32>
    %c0_3 = arith.constant 0 : index
    %c0_4 = arith.constant 0 : index
    %3 = vector.load %arg3[%c0_3, %c0_4] : memref<1x128xf32, #tpu.memory_space<vmem>>, vector<1x128xf32>
    %4 = vector.broadcast %3 : vector<1x128xf32> to vector<8x128xf32>
    %5 = arith.addf %2, %4 : vector<8x128xf32>
    %6 = arith.truncf %5 : vector<8x128xf32> to vector<8x128xbf16>
    %c0_5 = arith.constant 0 : index
    %c0_6 = arith.constant 0 : index
    %c0_7 = arith.constant 0 : index
    %7 = vector.load %arg9[%c0_5, %c0_6, %c0_7] : memref<3x8x128xbf16, #tpu.memory_space<vmem>>, vector<1x8x128xbf16>
    %8 = vector.shape_cast %7 : vector<1x8x128xbf16> to vector<8x128xbf16>
    %9 = vector.shape_cast %6 : vector<8x128xbf16> to vector<1x8x128xbf16>
    tpu.vector_store %arg9[%c0_5, %c0_6, %c0_7], %9 {strides = array<i32>} : memref<3x8x128xbf16, #tpu.memory_space<vmem>>, vector<1x8x128xbf16>,
    %c0_8 = arith.constant 0 : index
    %c0_9 = arith.constant 0 : index
    %c0_10 = arith.constant 0 : index
    %10 = vector.load %arg4[%c0_8, %c0_9, %c0_10] : memref<3x128x128xbf16, #tpu.memory_space<vmem>>, vector<1x128x128xbf16>
    %11 = vector.shape_cast %10 : vector<1x128x128xbf16> to vector<128x128xbf16>
    %cst_11 = arith.constant dense<0.000000e+00> : vector<8x128xf32>
    %12 = tpu.matmul %6, %11, %cst_11 {dimension_numbers = #tpu.dot_dimension_numbers<[1], [0], [0], [1], [0, 0, 1, 1], [], []>} : vector<8x128xbf16>, vector<128x128xbf16>, vector<8x128xf32> -> vector<8x128xf32>
    %c0_12 = arith.constant 0 : index
    %c0_13 = arith.constant 0 : index
    %c0_14 = arith.constant 0 : index
    %13 = vector.load %arg5[%c0_12, %c0_13, %c0_14] : memref<3x1x128xf32, #tpu.memory_space<vmem>>, vector<1x1x128xf32>
    %14 = vector.shape_cast %13 : vector<1x1x128xf32> to vector<1x128xf32>
    %15 = vector.broadcast %14 : vector<1x128xf32> to vector<8x128xf32>
    %16 = arith.addf %12, %15 : vector<8x128xf32>
    %17 = arith.truncf %16 : vector<8x128xf32> to vector<8x128xbf16>
    %c1 = arith.constant 1 : index
    %c0_15 = arith.constant 0 : index
    %c0_16 = arith.constant 0 : index
    %18 = vector.load %arg9[%c1, %c0_15, %c0_16] : memref<3x8x128xbf16, #tpu.memory_space<vmem>>, vector<1x8x128xbf16>
    %19 = vector.shape_cast %18 : vector<1x8x128xbf16> to vector<8x128xbf16>
    %20 = vector.shape_cast %17 : vector<8x128xbf16> to vector<1x8x128xbf16>
    tpu.vector_store %arg9[%c1, %c0_15, %c0_16], %20 {strides = array<i32>} : memref<3x8x128xbf16, #tpu.memory_space<vmem>>, vector<1x8x128xbf16>,
    %c1_17 = arith.constant 1 : index
    %c0_18 = arith.constant 0 : index
    %c0_19 = arith.constant 0 : index
    %21 = vector.load %arg4[%c1_17, %c0_18, %c0_19] : memref<3x128x128xbf16, #tpu.memory_space<vmem>>, vector<1x128x128xbf16>
    %22 = vector.shape_cast %21 : vector<1x128x128xbf16> to vector<128x128xbf16>
    %cst_20 = arith.constant dense<0.000000e+00> : vector<8x128xf32>
    %23 = tpu.matmul %17, %22, %cst_20 {dimension_numbers = #tpu.dot_dimension_numbers<[1], [0], [0], [1], [0, 0, 1, 1], [], []>} : vector<8x128xbf16>, vector<128x128xbf16>, vector<8x128xf32> -> vector<8x128xf32>
    %c1_21 = arith.constant 1 : index
    %c0_22 = arith.constant 0 : index
    %c0_23 = arith.constant 0 : index
    %24 = vector.load %arg5[%c1_21, %c0_22, %c0_23] : memref<3x1x128xf32, #tpu.memory_space<vmem>>, vector<1x1x128xf32>
    %25 = vector.shape_cast %24 : vector<1x1x128xf32> to vector<1x128xf32>
    %26 = vector.broadcast %25 : vector<1x128xf32> to vector<8x128xf32>
    %27 = arith.addf %23, %26 : vector<8x128xf32>
    %28 = arith.truncf %27 : vector<8x128xf32> to vector<8x128xbf16>
    %c2 = arith.constant 2 : index
    %c0_24 = arith.constant 0 : index
    %c0_25 = arith.constant 0 : index
    %29 = vector.load %arg9[%c2, %c0_24, %c0_25] : memref<3x8x128xbf16, #tpu.memory_space<vmem>>, vector<1x8x128xbf16>
    %30 = vector.shape_cast %29 : vector<1x8x128xbf16> to vector<8x128xbf16>
    %31 = vector.shape_cast %28 : vector<8x128xbf16> to vector<1x8x128xbf16>
    tpu.vector_store %arg9[%c2, %c0_24, %c0_25], %31 {strides = array<i32>} : memref<3x8x128xbf16, #tpu.memory_space<vmem>>, vector<1x8x128xbf16>,
    %c2_26 = arith.constant 2 : index
    %c0_27 = arith.constant 0 : index
    %c0_28 = arith.constant 0 : index
    %32 = vector.load %arg4[%c2_26, %c0_27, %c0_28] : memref<3x128x128xbf16, #tpu.memory_space<vmem>>, vector<1x128x128xbf16>
    %33 = vector.shape_cast %32 : vector<1x128x128xbf16> to vector<128x128xbf16>
    %cst_29 = arith.constant dense<0.000000e+00> : vector<8x128xf32>
    %34 = tpu.matmul %28, %33, %cst_29 {dimension_numbers = #tpu.dot_dimension_numbers<[1], [0], [0], [1], [0, 0, 1, 1], [], []>} : vector<8x128xbf16>, vector<128x128xbf16>, vector<8x128xf32> -> vector<8x128xf32>
    %c2_30 = arith.constant 2 : index
    %c0_31 = arith.constant 0 : index
    %c0_32 = arith.constant 0 : index
    %35 = vector.load %arg5[%c2_30, %c0_31, %c0_32] : memref<3x1x128xf32, #tpu.memory_space<vmem>>, vector<1x1x128xf32>
    %36 = vector.shape_cast %35 : vector<1x1x128xf32> to vector<1x128xf32>
    %37 = vector.broadcast %36 : vector<1x128xf32> to vector<8x128xf32>
    %38 = arith.addf %34, %37 : vector<8x128xf32>
    %39 = arith.truncf %38 : vector<8x128xf32> to vector<8x128xbf16>
    %c0_33 = arith.constant 0 : index
    %c0_34 = arith.constant 0 : index
    %40 = vector.load %arg6[%c0_33, %c0_34] : memref<128x128xbf16, #tpu.memory_space<vmem>>, vector<128x128xbf16>
    %cst_35 = arith.constant dense<0.000000e+00> : vector<8x128xf32>
    %41 = tpu.matmul %39, %40, %cst_35 {dimension_numbers = #tpu.dot_dimension_numbers<[1], [0], [0], [1], [0, 0, 1, 1], [], []>} : vector<8x128xbf16>, vector<128x128xbf16>, vector<8x128xf32> -> vector<8x128xf32>
    %c0_36 = arith.constant 0 : index
    %c0_37 = arith.constant 0 : index
    %42 = vector.load %arg7[%c0_36, %c0_37] : memref<1x128xf32, #tpu.memory_space<vmem>>, vector<1x128xf32>
    %43 = vector.broadcast %42 : vector<1x128xf32> to vector<8x128xf32>
    %44 = arith.addf %41, %43 : vector<8x128xf32>
    %c0_38 = arith.constant 0 : index
    %c0_39 = arith.constant 0 : index
    %45 = vector.load %arg8[%c0_38, %c0_39] : memref<8x128xf32, #tpu.memory_space<vmem>>, vector<8x128xf32>
    tpu.vector_store %arg8[%c0_38, %c0_39], %44 {strides = array<i32>} : memref<8x128xf32, #tpu.memory_space<vmem>>, vector<8x128xf32>,
    return
  }
  func.func @transform_0(%arg0: i32) -> (i32, i32) {
    %c0_i32 = arith.constant 0 : i32
    %c0_i32_0 = arith.constant 0 : i32
    return %arg0, %c0_i32 : i32, i32
  }
  func.func @transform_1(%arg0: i32) -> (i32, i32) {
    %c0_i32 = arith.constant 0 : i32
    %c0_i32_0 = arith.constant 0 : i32
    %c0_i32_1 = arith.constant 0 : i32
    return %c0_i32, %c0_i32_0 : i32, i32
  }
  func.func @transform_2(%arg0: i32) -> (i32, i32) {
    %c0_i32 = arith.constant 0 : i32
    %c0_i32_0 = arith.constant 0 : i32
    %c0_i32_1 = arith.constant 0 : i32
    return %c0_i32, %c0_i32_0 : i32, i32
  }
  func.func @transform_3(%arg0: i32) -> (i32, i32, i32) {
    %c0_i32 = arith.constant 0 : i32
    %c0_i32_0 = arith.constant 0 : i32
    %c0_i32_1 = arith.constant 0 : i32
    %c0_i32_2 = arith.constant 0 : i32
    return %c0_i32, %c0_i32_0, %c0_i32_1 : i32, i32, i32
  }
  func.func @transform_4(%arg0: i32) -> (i32, i32, i32) {
    %c0_i32 = arith.constant 0 : i32
    %c0_i32_0 = arith.constant 0 : i32
    %c0_i32_1 = arith.constant 0 : i32
    %c0_i32_2 = arith.constant 0 : i32
    return %c0_i32, %c0_i32_0, %c0_i32_1 : i32, i32, i32
  }
  func.func @transform_5(%arg0: i32) -> (i32, i32) {
    %c0_i32 = arith.constant 0 : i32
    %c0_i32_0 = arith.constant 0 : i32
    %c0_i32_1 = arith.constant 0 : i32
    return %c0_i32, %c0_i32_0 : i32, i32
  }
  func.func @transform_6(%arg0: i32) -> (i32, i32) {
    %c0_i32 = arith.constant 0 : i32
    %c0_i32_0 = arith.constant 0 : i32
    %c0_i32_1 = arith.constant 0 : i32
    return %c0_i32, %c0_i32_0 : i32, i32
  }
  func.func @transform_7(%arg0: i32) -> (i32, i32) {
    %c0_i32 = arith.constant 0 : i32
    %c0_i32_0 = arith.constant 0 : i32
    return %arg0, %c0_i32 : i32, i32
  }
  func.func @transform_8(%arg0: i32) -> (i32, i32, i32) {
    %c0_i32 = arith.constant 0 : i32
    %c0_i32_0 = arith.constant 0 : i32
    %c0_i32_1 = arith.constant 0 : i32
    return %c0_i32, %arg0, %c0_i32_0 : i32, i32, i32
  }
}

</mosaic_0001>

<llo_original>
// kernel: _jit_forward.1
$region0: #{_jit_forward.1}
  #allocation0 [shape = 'u32[]', space=smem, size = 0x4, offset = 0x4, fixed_abs, tag = 'smem constant byte address 0x4 - core index']
  #allocation1 [shape = 'u32[144,128]{1,0:T(1,128)}', space=vmem, size = 0x12000, scoped, tag = 'internal scratch']
  %s0 = inlined_call_operand.vmem [shape: bf16[8,128], index: 0, kind: input, shape index: {}]
  %s1 = inlined_call_operand.hbm [shape: bf16[128,128], index: 1, kind: input, shape index: {}]
  %s2 = inlined_call_operand.vmem [shape: f32[1,128], index: 2, kind: input, shape index: {}]
  %s3 = inlined_call_operand.hbm [shape: bf16[3,128,128], index: 3, kind: input, shape index: {}]
  %s4 = inlined_call_operand.vmem [shape: f32[3,1,128], index: 4, kind: input, shape index: {}]
  %s5 = inlined_call_operand.hbm [shape: bf16[128,128], index: 5, kind: input, shape index: {}]
  %s6 = inlined_call_operand.vmem [shape: f32[1,128], index: 6, kind: input, shape index: {}]
  %s7 = inlined_call_operand.hbm [shape: f32[8,128], index: 7, kind: output, shape index: {0}]
  %s8 = inlined_call_operand.vmem [shape: bf16[3,8,128], index: 8, kind: output, shape index: {1}]
  %9 = xla_tuple %s7, %s8
  %s10 = sld [smem:[#allocation0]]
  $region58: #{_jit_forward.1} parent=0
    _
  %s12 = ssub.s32 1, %s10
  %s13 = scalar_select 0, %s12, %s10
  $region1: #{_jit_forward.1} parent=0
    #allocation2 [shape = 'u8[32768]{0}', space=vmem, size = 0x8000, scoped, tag = 'input window, operand 1, single buffered']
    #allocation3 [shape = 's32[1]{0}', space=sflag, size = 0x4, scoped, tag = 'scoped memory for _jit_forward.1']
    #allocation4 [shape = 's32[1]{0}', space=sflag, size = 0x4, scoped, tag = 'scoped memory for _jit_forward.1']
    #allocation5 [shape = 'u8[98304]{0}', space=vmem, size = 0x18000, scoped, tag = 'input window, operand 3, single buffered']
    #allocation6 [shape = 's32[1]{0}', space=sflag, size = 0x4, scoped, tag = 'scoped memory for _jit_forward.1']
    #allocation7 [shape = 'u8[32768]{0}', space=vmem, size = 0x8000, scoped, tag = 'input window, operand 5, single buffered']
    #allocation8 [shape = 'u8[4096]{0}', space=vmem, size = 0x1000, scoped, tag = 'output window, operand 0, single buffered']
    %14 = vsyncpa [#allocation3], 0
    %15 = vsyncpa [#allocation6], 0
    %16 = vsyncpa [#allocation4], 0
    // Predicated region
    $region2: #{_jit_forward.1} parent=1 // pred_check
      _
    $region3: #{_jit_forward.1} parent=1 // pred_check_branch
      %18 = sbr.rel (0) target = $region5
    $region4: #{_jit_forward.1} parent=1 // pred_region
      _
    $region5: #{_jit_forward.1} parent=1 // pred_fallthru
      _
    // Predicated region
    $region6: #{_jit_forward.1} parent=1 // pred_check
      _
    $region7: #{_jit_forward.1} parent=1 // pred_check_branch
      %20 = sbr.rel (0) target = $region9
    $region8: #{_jit_forward.1} parent=1 // pred_region
      %s22 = ssub.s32 1024, 1024
      %23 = vsyncadd [#allocation3], %s22
      %s24 = sshll.u32 [#allocation2], 4
      %s25 = int_to_ptr.vmem [resolvable:$true] %s24
      %30 = dma.hbm_to_vmem [thread:$0]  %s1, 1024, %s25, [#allocation3], 64, 64, 4
    $region9: #{_jit_forward.1} parent=1 // pred_fallthru
      _
    // Predicated region
    $region10: #{_jit_forward.1} parent=1 // pred_check
      _
    $region11: #{_jit_forward.1} parent=1 // pred_check_branch
      %32 = sbr.rel (0) target = $region13
    $region12: #{_jit_forward.1} parent=1 // pred_region
      _
    $region13: #{_jit_forward.1} parent=1 // pred_fallthru
      _
    // Predicated region
    $region14: #{_jit_forward.1} parent=1 // pred_check
      _
    $region15: #{_jit_forward.1} parent=1 // pred_check_branch
      %34 = sbr.rel (0) target = $region17
    $region16: #{_jit_forward.1} parent=1 // pred_region
      %s36 = ssub.s32 3072, 3072
      %37 = vsyncadd [#allocation6], %s36
      %s38 = sshll.u32 [#allocation5], 4
      %s39 = int_to_ptr.vmem [resolvable:$true] %s38
      %44 = dma.hbm_to_vmem [thread:$0]  %s3, 3072, %s39, [#allocation6], 64, 64, 4
    $region17: #{_jit_forward.1} parent=1 // pred_fallthru
      _
    // Predicated region
    $region18: #{_jit_forward.1} parent=1 // pred_check
      _
    $region19: #{_jit_forward.1} parent=1 // pred_check_branch
      %46 = sbr.rel (0) target = $region21
    $region20: #{_jit_forward.1} parent=1 // pred_region
      _
    $region21: #{_jit_forward.1} parent=1 // pred_fallthru
      _
    // Predicated region
    $region22: #{_jit_forward.1} parent=1 // pred_check
      _
    $region23: #{_jit_forward.1} parent=1 // pred_check_branch
      %48 = sbr.rel (0) target = $region25
    $region24: #{_jit_forward.1} parent=1 // pred_region
      %s50 = ssub.s32 1024, 1024
      %51 = vsyncadd [#allocation6], %s50
      %s52 = sshll.u32 [#allocation7], 4
      %s53 = int_to_ptr.vmem [resolvable:$true] %s52
      %58 = dma.hbm_to_vmem [thread:$0]  %s5, 1024, %s53, [#allocation6], 64, 64, 4
    $region25: #{_jit_forward.1} parent=1 // pred_fallthru
      _
    // Predicated region
    $region26: #{_jit_forward.1} parent=1 // pred_check
      _
    $region27: #{_jit_forward.1} parent=1 // pred_check_branch
      %60 = sbr.rel (0) target = $region29
    $region28: #{_jit_forward.1} parent=1 // pred_region
      _
    $region29: #{_jit_forward.1} parent=1 // pred_fallthru
      _
    // Predicated region
    $region30: #{_jit_forward.1} parent=1 // pred_check
      _
    $region31: #{_jit_forward.1} parent=1 // pred_check_branch
      %62 = sbr.rel (0) target = $region33
    $region32: #{_jit_forward.1} parent=1 // pred_region
      %63 = dma.done [#allocation3], 1024
    $region33: #{_jit_forward.1} parent=1 // pred_fallthru
      _
    // Predicated region
    $region34: #{_jit_forward.1} parent=1 // pred_check
      _
    $region35: #{_jit_forward.1} parent=1 // pred_check_branch
      %65 = sbr.rel (0) target = $region37
    $region36: #{_jit_forward.1} parent=1 // pred_region
      %66 = dma.done [#allocation6], 3072
    $region37: #{_jit_forward.1} parent=1 // pred_fallthru
      _
    // Predicated region
    $region38: #{_jit_forward.1} parent=1 // pred_check
      _
    $region39: #{_jit_forward.1} parent=1 // pred_check_branch
      %68 = sbr.rel (0) target = $region41
    $region40: #{_jit_forward.1} parent=1 // pred_region
      %69 = dma.done [#allocation6], 1024
    $region41: #{_jit_forward.1} parent=1 // pred_fallthru
      _
    %v71 = vld [vmem:[%s0] sm:$0xf]
    %v72 = vld [vmem:[#allocation2] sm:$0xf]
    %v73 = vld [vmem:[#allocation2 + $0x4] sm:$0xf]
    %v74 = vld [vmem:[#allocation2 + $0x8] sm:$0xf]
    %v75 = vld [vmem:[#allocation2 + $0xc] sm:$0xf]
    %v76 = vld [vmem:[#allocation2 + $0x10] sm:$0xf]
    %v77 = vld [vmem:[#allocation2 + $0x14] sm:$0xf]
    %v78 = vld [vmem:[#allocation2 + $0x18] sm:$0xf]
    %v79 = vld [vmem:[#allocation2 + $0x1c] sm:$0xf]
    %v80 = vld [vmem:[#allocation2 + $0x20] sm:$0xf]
    %v81 = vld [vmem:[#allocation2 + $0x24] sm:$0xf]
    %v82 = vld [vmem:[#allocation2 + $0x28] sm:$0xf]
    %v83 = vld [vmem:[#allocation2 + $0x2c] sm:$0xf]
    %v84 = vld [vmem:[#allocation2 + $0x30] sm:$0xf]
    %v85 = vld [vmem:[#allocation2 + $0x34] sm:$0xf]
    %v86 = vld [vmem:[#allocation2 + $0x38] sm:$0xf]
    %v87 = vld [vmem:[#allocation2 + $0x3c] sm:$0xf]
    %v88 = vld [vmem:[%s2] sm:$0x1]
    %v90 = vlaneseq
    %v91 = vshrl.u32 %v90, 7
    %v92 = vsub.s32 0, %v91
    %v93 = vrot.slane %v88, %v92
    %v111 = vunpack.c.l.b16 %v72
    %v112 = vunpack.c.l.b16 %v73
    %v113 = vunpack.c.l.b16 %v74
    %v114 = vunpack.c.l.b16 %v75
    %v115 = vunpack.c.l.b16 %v76
    %v116 = vunpack.c.l.b16 %v77
    %v117 = vunpack.c.l.b16 %v78
    %v118 = vunpack.c.l.b16 %v79
    %v119 = vunpack.c.l.b16 %v80
    %v120 = vunpack.c.l.b16 %v81
    %v121 = vunpack.c.l.b16 %v82
    %v122 = vunpack.c.l.b16 %v83
    %v123 = vunpack.c.l.b16 %v84
    %v124 = vunpack.c.l.b16 %v85
    %v125 = vunpack.c.l.b16 %v86
    %v126 = vunpack.c.l.b16 %v87
    %v127 = vpack.c.b16 %v112, %v111
    %v128 = vpack.c.b16 %v114, %v113
    %v129 = vpack.c.b16 %v116, %v115
    %v130 = vpack.c.b16 %v118, %v117
    %v131 = vpack.c.b16 %v120, %v119
    %v132 = vpack.c.b16 %v122, %v121
    %v133 = vpack.c.b16 %v124, %v123
    %v134 = vpack.c.b16 %v126, %v125
    %143 = vmatprep.subr.bf16.mxu0 0
    %144 = vmatpush1.bf16.msra.mxu0 %v127
    %145 = vmatprep.subr.bf16.mxu0 0
    %146 = vmatpush1.bf16.msra.mxu0 %v128
    %147 = vmatprep.subr.bf16.mxu0 0
    %148 = vmatpush1.bf16.msra.mxu0 %v129
    %149 = vmatprep.subr.bf16.mxu0 0
    %150 = vmatpush1.bf16.msra.mxu0 %v130
    %151 = vmatprep.subr.bf16.mxu0 0
    %152 = vmatpush1.bf16.msra.mxu0 %v131
    %153 = vmatprep.subr.bf16.mxu0 0
    %154 = vmatpush1.bf16.msra.mxu0 %v132
    %155 = vmatprep.subr.bf16.mxu0 0
    %156 = vmatpush1.bf16.msra.mxu0 %v133
    %157 = vmatprep.subr.bf16.mxu0 0
    %158 = vmatpush1.bf16.msra.mxu0 %v134
    %159 = vmatprep.subr.bf16.mxu0 0
    %160 = vmatpush1.bf16.msra.mxu0 0
    %161 = vmatprep.subr.bf16.mxu0 0
    %162 = vmatpush1.bf16.msra.mxu0 0
    %163 = vmatprep.subr.bf16.mxu0 0
    %164 = vmatpush1.bf16.msra.mxu0 0
    %165 = vmatprep.subr.bf16.mxu0 0
    %166 = vmatpush1.bf16.msra.mxu0 0
    %167 = vmatprep.subr.bf16.mxu0 0
    %168 = vmatpush1.bf16.msra.mxu0 0
    %169 = vmatprep.subr.bf16.mxu0 0
    %170 = vmatpush1.bf16.msra.mxu0 0
    %171 = vmatprep.subr.bf16.mxu0 0
    %172 = vmatpush1.bf16.msra.mxu0 0
    %173 = vmatprep.subr.bf16.mxu0 0
    %174 = vmatpush1.bf16.msra.mxu0 0
    %175 = vmatprep.mubr.bf16.mxu0 0
    %176 = vmatmul.mubr.bf16.gmra.mrb[0].mxu0 %v71
    %v177 = vpop.f32.mrb[0].mxu0
    %v178 = vadd.f32 %v93, %v177
    %v179 = vpop.f32.mrb[0].mxu0
    %v180 = vpop.f32.mrb[0].mxu0
    %v181 = vpop.f32.mrb[0].mxu0
    %182 = vdwg.mxu0
    %v183 = vpack.c.bf16 %v178, %v178
    %184 = vst [vmem:[%s8] sm:$0xf] %v183
    %v185 = vld [vmem:[#allocation5] sm:$0xf]
    %v186 = vld [vmem:[#allocation5 + $0x4] sm:$0xf]
    %v187 = vld [vmem:[#allocation5 + $0x8] sm:$0xf]
    %v188 = vld [vmem:[#allocation5 + $0xc] sm:$0xf]
    %v189 = vld [vmem:[#allocation5 + $0x10] sm:$0xf]
    %v190 = vld [vmem:[#allocation5 + $0x14] sm:$0xf]
    %v191 = vld [vmem:[#allocation5 + $0x18] sm:$0xf]
    %v192 = vld [vmem:[#allocation5 + $0x1c] sm:$0xf]
    %v193 = vld [vmem:[#allocation5 + $0x20] sm:$0xf]
    %v194 = vld [vmem:[#allocation5 + $0x24] sm:$0xf]
    %v195 = vld [vmem:[#allocation5 + $0x28] sm:$0xf]
    %v196 = vld [vmem:[#allocation5 + $0x2c] sm:$0xf]
    %v197 = vld [vmem:[#allocation5 + $0x30] sm:$0xf]
    %v198 = vld [vmem:[#allocation5 + $0x34] sm:$0xf]
    %v199 = vld [vmem:[#allocation5 + $0x38] sm:$0xf]
    %v200 = vld [vmem:[#allocation5 + $0x3c] sm:$0xf]
    %v201 = vld [vmem:[%s4] sm:$0x1]
    %v203 = vlaneseq
    %v204 = vshrl.u32 %v203, 7
    %v205 = vsub.s32 0, %v204
    %v206 = vrot.slane %v201, %v205
    %v224 = vunpack.c.l.b16 %v185
    %v225 = vunpack.c.l.b16 %v186
    %v226 = vunpack.c.l.b16 %v187
    %v227 = vunpack.c.l.b16 %v188
    %v228 = vunpack.c.l.b16 %v189
    %v229 = vunpack.c.l.b16 %v190
    %v230 = vunpack.c.l.b16 %v191
    %v231 = vunpack.c.l.b16 %v192
    %v232 = vunpack.c.l.b16 %v193
    %v233 = vunpack.c.l.b16 %v194
    %v234 = vunpack.c.l.b16 %v195
    %v235 = vunpack.c.l.b16 %v196
    %v236 = vunpack.c.l.b16 %v197
    %v237 = vunpack.c.l.b16 %v198
    %v238 = vunpack.c.l.b16 %v199
    %v239 = vunpack.c.l.b16 %v200
    %v240 = vpack.c.b16 %v225, %v224
    %v241 = vpack.c.b16 %v227, %v226
    %v242 = vpack.c.b16 %v229, %v228
    %v243 = vpack.c.b16 %v231, %v230
    %v244 = vpack.c.b16 %v233, %v232
    %v245 = vpack.c.b16 %v235, %v234
    %v246 = vpack.c.b16 %v237, %v236
    %v247 = vpack.c.b16 %v239, %v238
    %256 = vmatprep.subr.bf16.mxu0 0
    %257 = vmatpush1.bf16.msra.mxu0 %v240
    %258 = vmatprep.subr.bf16.mxu0 0
    %259 = vmatpush1.bf16.msra.mxu0 %v241
    %260 = vmatprep.subr.bf16.mxu0 0
    %261 = vmatpush1.bf16.msra.mxu0 %v242
    %262 = vmatprep.subr.bf16.mxu0 0
    %263 = vmatpush1.bf16.msra.mxu0 %v243
    %264 = vmatprep.subr.bf16.mxu0 0
    %265 = vmatpush1.bf16.msra.mxu0 %v244
    %266 = vmatprep.subr.bf16.mxu0 0
    %267 = vmatpush1.bf16.msra.mxu0 %v245
    %268 = vmatprep.subr.bf16.mxu0 0
    %269 = vmatpush1.bf16.msra.mxu0 %v246
    %270 = vmatprep.subr.bf16.mxu0 0
    %271 = vmatpush1.bf16.msra.mxu0 %v247
    %272 = vmatprep.subr.bf16.mxu0 0
    %273 = vmatpush1.bf16.msra.mxu0 0
    %274 = vmatprep.subr.bf16.mxu0 0
    %275 = vmatpush1.bf16.msra.mxu0 0
    %276 = vmatprep.subr.bf16.mxu0 0
    %277 = vmatpush1.bf16.msra.mxu0 0
    %278 = vmatprep.subr.bf16.mxu0 0
    %279 = vmatpush1.bf16.msra.mxu0 0
    %280 = vmatprep.subr.bf16.mxu0 0
    %281 = vmatpush1.bf16.msra.mxu0 0
    %282 = vmatprep.subr.bf16.mxu0 0
    %283 = vmatpush1.bf16.msra.mxu0 0
    %284 = vmatprep.subr.bf16.mxu0 0
    %285 = vmatpush1.bf16.msra.mxu0 0
    %286 = vmatprep.subr.bf16.mxu0 0
    %287 = vmatpush1.bf16.msra.mxu0 0
    %288 = vmatprep.mubr.bf16.mxu0 0
    %289 = vmatmul.mubr.bf16.gmra.mrb[0].mxu0 %v183
    %v290 = vpop.f32.mrb[0].mxu0
    %v291 = vadd.f32 %v206, %v290
    %v292 = vpop.f32.mrb[0].mxu0
    %v293 = vpop.f32.mrb[0].mxu0
    %v294 = vpop.f32.mrb[0].mxu0
    %295 = vdwg.mxu0
    %v296 = vpack.c.bf16 %v291, %v291
    %s297 = scalar_lea.vmem %s8, 4
    %298 = vst [vmem:[%s297] sm:$0xf] %v296
    %s299 = scalar_lea.vmem [#allocation5], 64
    %v300 = vld [vmem:[%s299] sm:$0xf]
    %v301 = vld [vmem:[%s299 + $0x4] sm:$0xf]
    %v302 = vld [vmem:[%s299 + $0x8] sm:$0xf]
    %v303 = vld [vmem:[%s299 + $0xc] sm:$0xf]
    %v304 = vld [vmem:[%s299 + $0x10] sm:$0xf]
    %v305 = vld [vmem:[%s299 + $0x14] sm:$0xf]
    %v306 = vld [vmem:[%s299 + $0x18] sm:$0xf]
    %v307 = vld [vmem:[%s299 + $0x1c] sm:$0xf]
    %v308 = vld [vmem:[%s299 + $0x20] sm:$0xf]
    %v309 = vld [vmem:[%s299 + $0x24] sm:$0xf]
    %v310 = vld [vmem:[%s299 + $0x28] sm:$0xf]
    %v311 = vld [vmem:[%s299 + $0x2c] sm:$0xf]
    %v312 = vld [vmem:[%s299 + $0x30] sm:$0xf]
    %v313 = vld [vmem:[%s299 + $0x34] sm:$0xf]
    %v314 = vld [vmem:[%s299 + $0x38] sm:$0xf]
    %v315 = vld [vmem:[%s299 + $0x3c] sm:$0xf]
    %s316 = scalar_lea.vmem %s4, 1
    %v317 = vld [vmem:[%s316] sm:$0x1]
    %v319 = vlaneseq
    %v320 = vshrl.u32 %v319, 7
    %v321 = vsub.s32 0, %v320
    %v322 = vrot.slane %v317, %v321
    %v340 = vunpack.c.l.b16 %v300
    %v341 = vunpack.c.l.b16 %v301
    %v342 = vunpack.c.l.b16 %v302
    %v343 = vunpack.c.l.b16 %v303
    %v344 = vunpack.c.l.b16 %v304
    %v345 = vunpack.c.l.b16 %v305
    %v346 = vunpack.c.l.b16 %v306
    %v347 = vunpack.c.l.b16 %v307
    %v348 = vunpack.c.l.b16 %v308
    %v349 = vunpack.c.l.b16 %v309
    %v350 = vunpack.c.l.b16 %v310
    %v351 = vunpack.c.l.b16 %v311
    %v352 = vunpack.c.l.b16 %v312
    %v353 = vunpack.c.l.b16 %v313
    %v354 = vunpack.c.l.b16 %v314
    %v355 = vunpack.c.l.b16 %v315
    %v356 = vpack.c.b16 %v341, %v340
    %v357 = vpack.c.b16 %v343, %v342
    %v358 = vpack.c.b16 %v345, %v344
    %v359 = vpack.c.b16 %v347, %v346
    %v360 = vpack.c.b16 %v349, %v348
    %v361 = vpack.c.b16 %v351, %v350
    %v362 = vpack.c.b16 %v353, %v352
    %v363 = vpack.c.b16 %v355, %v354
    %372 = vmatprep.subr.bf16.mxu0 0
    %373 = vmatpush1.bf16.msra.mxu0 %v356
    %374 = vmatprep.subr.bf16.mxu0 0
    %375 = vmatpush1.bf16.msra.mxu0 %v357
    %376 = vmatprep.subr.bf16.mxu0 0
    %377 = vmatpush1.bf16.msra.mxu0 %v358
    %378 = vmatprep.subr.bf16.mxu0 0
    %379 = vmatpush1.bf16.msra.mxu0 %v359
    %380 = vmatprep.subr.bf16.mxu0 0
    %381 = vmatpush1.bf16.msra.mxu0 %v360
    %382 = vmatprep.subr.bf16.mxu0 0
    %383 = vmatpush1.bf16.msra.mxu0 %v361
    %384 = vmatprep.subr.bf16.mxu0 0
    %385 = vmatpush1.bf16.msra.mxu0 %v362
    %386 = vmatprep.subr.bf16.mxu0 0
    %387 = vmatpush1.bf16.msra.mxu0 %v363
    %388 = vmatprep.subr.bf16.mxu0 0
    %389 = vmatpush1.bf16.msra.mxu0 0
    %390 = vmatprep.subr.bf16.mxu0 0
    %391 = vmatpush1.bf16.msra.mxu0 0
    %392 = vmatprep.subr.bf16.mxu0 0
    %393 = vmatpush1.bf16.msra.mxu0 0
    %394 = vmatprep.subr.bf16.mxu0 0
    %395 = vmatpush1.bf16.msra.mxu0 0
    %396 = vmatprep.subr.bf16.mxu0 0
    %397 = vmatpush1.bf16.msra.mxu0 0
    %398 = vmatprep.subr.bf16.mxu0 0
    %399 = vmatpush1.bf16.msra.mxu0 0
    %400 = vmatprep.subr.bf16.mxu0 0
    %401 = vmatpush1.bf16.msra.mxu0 0
    %402 = vmatprep.subr.bf16.mxu0 0
    %403 = vmatpush1.bf16.msra.mxu0 0
    %404 = vmatprep.mubr.bf16.mxu0 0
    %405 = vmatmul.mubr.bf16.gmra.mrb[0].mxu0 %v296
    %v406 = vpop.f32.mrb[0].mxu0
    %v407 = vadd.f32 %v322, %v406
    %v408 = vpop.f32.mrb[0].mxu0
    %v409 = vpop.f32.mrb[0].mxu0
    %v410 = vpop.f32.mrb[0].mxu0
    %411 = vdwg.mxu0
    %v412 = vpack.c.bf16 %v407, %v407
    %s413 = scalar_lea.vmem %s8, 8
    %414 = vst [vmem:[%s413] sm:$0xf] %v412
    %s415 = scalar_lea.vmem [#allocation5], 128
    %v416 = vld [vmem:[%s415] sm:$0xf]
    %v417 = vld [vmem:[%s415 + $0x4] sm:$0xf]
    %v418 = vld [vmem:[%s415 + $0x8] sm:$0xf]
    %v419 = vld [vmem:[%s415 + $0xc] sm:$0xf]
    %v420 = vld [vmem:[%s415 + $0x10] sm:$0xf]
    %v421 = vld [vmem:[%s415 + $0x14] sm:$0xf]
    %v422 = vld [vmem:[%s415 + $0x18] sm:$0xf]
    %v423 = vld [vmem:[%s415 + $0x1c] sm:$0xf]
    %v424 = vld [vmem:[%s415 + $0x20] sm:$0xf]
    %v425 = vld [vmem:[%s415 + $0x24] sm:$0xf]
    %v426 = vld [vmem:[%s415 + $0x28] sm:$0xf]
    %v427 = vld [vmem:[%s415 + $0x2c] sm:$0xf]
    %v428 = vld [vmem:[%s415 + $0x30] sm:$0xf]
    %v429 = vld [vmem:[%s415 + $0x34] sm:$0xf]
    %v430 = vld [vmem:[%s415 + $0x38] sm:$0xf]
    %v431 = vld [vmem:[%s415 + $0x3c] sm:$0xf]
    %s432 = scalar_lea.vmem %s4, 2
    %v433 = vld [vmem:[%s432] sm:$0x1]
    %v435 = vlaneseq
    %v436 = vshrl.u32 %v435, 7
    %v437 = vsub.s32 0, %v436
    %v438 = vrot.slane %v433, %v437
    %v456 = vunpack.c.l.b16 %v416
    %v457 = vunpack.c.l.b16 %v417
    %v458 = vunpack.c.l.b16 %v418
    %v459 = vunpack.c.l.b16 %v419
    %v460 = vunpack.c.l.b16 %v420
    %v461 = vunpack.c.l.b16 %v421
    %v462 = vunpack.c.l.b16 %v422
    %v463 = vunpack.c.l.b16 %v423
    %v464 = vunpack.c.l.b16 %v424
    %v465 = vunpack.c.l.b16 %v425
    %v466 = vunpack.c.l.b16 %v426
    %v467 = vunpack.c.l.b16 %v427
    %v468 = vunpack.c.l.b16 %v428
    %v469 = vunpack.c.l.b16 %v429
    %v470 = vunpack.c.l.b16 %v430
    %v471 = vunpack.c.l.b16 %v431
    %v472 = vpack.c.b16 %v457, %v456
    %v473 = vpack.c.b16 %v459, %v458
    %v474 = vpack.c.b16 %v461, %v460
    %v475 = vpack.c.b16 %v463, %v462
    %v476 = vpack.c.b16 %v465, %v464
    %v477 = vpack.c.b16 %v467, %v466
    %v478 = vpack.c.b16 %v469, %v468
    %v479 = vpack.c.b16 %v471, %v470
    %488 = vmatprep.subr.bf16.mxu0 0
    %489 = vmatpush1.bf16.msra.mxu0 %v472
    %490 = vmatprep.subr.bf16.mxu0 0
    %491 = vmatpush1.bf16.msra.mxu0 %v473
    %492 = vmatprep.subr.bf16.mxu0 0
    %493 = vmatpush1.bf16.msra.mxu0 %v474
    %494 = vmatprep.subr.bf16.mxu0 0
    %495 = vmatpush1.bf16.msra.mxu0 %v475
    %496 = vmatprep.subr.bf16.mxu0 0
    %497 = vmatpush1.bf16.msra.mxu0 %v476
    %498 = vmatprep.subr.bf16.mxu0 0
    %499 = vmatpush1.bf16.msra.mxu0 %v477
    %500 = vmatprep.subr.bf16.mxu0 0
    %501 = vmatpush1.bf16.msra.mxu0 %v478
    %502 = vmatprep.subr.bf16.mxu0 0
    %503 = vmatpush1.bf16.msra.mxu0 %v479
    %504 = vmatprep.subr.bf16.mxu0 0
    %505 = vmatpush1.bf16.msra.mxu0 0
    %506 = vmatprep.subr.bf16.mxu0 0
    %507 = vmatpush1.bf16.msra.mxu0 0
    %508 = vmatprep.subr.bf16.mxu0 0
    %509 = vmatpush1.bf16.msra.mxu0 0
    %510 = vmatprep.subr.bf16.mxu0 0
    %511 = vmatpush1.bf16.msra.mxu0 0
    %512 = vmatprep.subr.bf16.mxu0 0
    %513 = vmatpush1.bf16.msra.mxu0 0
    %514 = vmatprep.subr.bf16.mxu0 0
    %515 = vmatpush1.bf16.msra.mxu0 0
    %516 = vmatprep.subr.bf16.mxu0 0
    %517 = vmatpush1.bf16.msra.mxu0 0
    %518 = vmatprep.subr.bf16.mxu0 0
    %519 = vmatpush1.bf16.msra.mxu0 0
    %520 = vmatprep.mubr.bf16.mxu0 0
    %521 = vmatmul.mubr.bf16.gmra.mrb[0].mxu0 %v412
    %v522 = vpop.f32.mrb[0].mxu0
    %v523 = vadd.f32 %v438, %v522
    %v524 = vpop.f32.mrb[0].mxu0
    %v525 = vpop.f32.mrb[0].mxu0
    %v526 = vpop.f32.mrb[0].mxu0
    %527 = vdwg.mxu0
    %v528 = vpack.c.bf16 %v523, %v523
    %v529 = vld [vmem:[#allocation7] sm:$0xf]
    %v530 = vld [vmem:[#allocation7 + $0x4] sm:$0xf]
    %v531 = vld [vmem:[#allocation7 + $0x8] sm:$0xf]
    %v532 = vld [vmem:[#allocation7 + $0xc] sm:$0xf]
    %v533 = vld [vmem:[#allocation7 + $0x10] sm:$0xf]
    %v534 = vld [vmem:[#allocation7 + $0x14] sm:$0xf]
    %v535 = vld [vmem:[#allocation7 + $0x18] sm:$0xf]
    %v536 = vld [vmem:[#allocation7 + $0x1c] sm:$0xf]
    %v537 = vld [vmem:[#allocation7 + $0x20] sm:$0xf]
    %v538 = vld [vmem:[#allocation7 + $0x24] sm:$0xf]
    %v539 = vld [vmem:[#allocation7 + $0x28] sm:$0xf]
    %v540 = vld [vmem:[#allocation7 + $0x2c] sm:$0xf]
    %v541 = vld [vmem:[#allocation7 + $0x30] sm:$0xf]
    %v542 = vld [vmem:[#allocation7 + $0x34] sm:$0xf]
    %v543 = vld [vmem:[#allocation7 + $0x38] sm:$0xf]
    %v544 = vld [vmem:[#allocation7 + $0x3c] sm:$0xf]
    %v545 = vld [vmem:[%s6] sm:$0x1]
    %v547 = vlaneseq
    %v548 = vshrl.u32 %v547, 7
    %v549 = vsub.s32 0, %v548
    %v550 = vrot.slane %v545, %v549
    %v568 = vunpack.c.l.b16 %v529
    %v569 = vunpack.c.l.b16 %v530
    %v570 = vunpack.c.l.b16 %v531
    %v571 = vunpack.c.l.b16 %v532
    %v572 = vunpack.c.l.b16 %v533
    %v573 = vunpack.c.l.b16 %v534
    %v574 = vunpack.c.l.b16 %v535
    %v575 = vunpack.c.l.b16 %v536
    %v576 = vunpack.c.l.b16 %v537
    %v577 = vunpack.c.l.b16 %v538
    %v578 = vunpack.c.l.b16 %v539
    %v579 = vunpack.c.l.b16 %v540
    %v580 = vunpack.c.l.b16 %v541
    %v581 = vunpack.c.l.b16 %v542
    %v582 = vunpack.c.l.b16 %v543
    %v583 = vunpack.c.l.b16 %v544
    %v584 = vpack.c.b16 %v569, %v568
    %v585 = vpack.c.b16 %v571, %v570
    %v586 = vpack.c.b16 %v573, %v572
    %v587 = vpack.c.b16 %v575, %v574
    %v588 = vpack.c.b16 %v577, %v576
    %v589 = vpack.c.b16 %v579, %v578
    %v590 = vpack.c.b16 %v581, %v580
    %v591 = vpack.c.b16 %v583, %v582
    %600 = vmatprep.subr.bf16.mxu0 0
    %601 = vmatpush1.bf16.msra.mxu0 %v584
    %602 = vmatprep.subr.bf16.mxu0 0
    %603 = vmatpush1.bf16.msra.mxu0 %v585
    %604 = vmatprep.subr.bf16.mxu0 0
    %605 = vmatpush1.bf16.msra.mxu0 %v586
    %606 = vmatprep.subr.bf16.mxu0 0
    %607 = vmatpush1.bf16.msra.mxu0 %v587
    %608 = vmatprep.subr.bf16.mxu0 0
    %609 = vmatpush1.bf16.msra.mxu0 %v588
    %610 = vmatprep.subr.bf16.mxu0 0
    %611 = vmatpush1.bf16.msra.mxu0 %v589
    %612 = vmatprep.subr.bf16.mxu0 0
    %613 = vmatpush1.bf16.msra.mxu0 %v590
    %614 = vmatprep.subr.bf16.mxu0 0
    %615 = vmatpush1.bf16.msra.mxu0 %v591
    %616 = vmatprep.subr.bf16.mxu0 0
    %617 = vmatpush1.bf16.msra.mxu0 0
    %618 = vmatprep.subr.bf16.mxu0 0
    %619 = vmatpush1.bf16.msra.mxu0 0
    %620 = vmatprep.subr.bf16.mxu0 0
    %621 = vmatpush1.bf16.msra.mxu0 0
    %622 = vmatprep.subr.bf16.mxu0 0
    %623 = vmatpush1.bf16.msra.mxu0 0
    %624 = vmatprep.subr.bf16.mxu0 0
    %625 = vmatpush1.bf16.msra.mxu0 0
    %626 = vmatprep.subr.bf16.mxu0 0
    %627 = vmatpush1.bf16.msra.mxu0 0
    %628 = vmatprep.subr.bf16.mxu0 0
    %629 = vmatpush1.bf16.msra.mxu0 0
    %630 = vmatprep.subr.bf16.mxu0 0
    %631 = vmatpush1.bf16.msra.mxu0 0
    %632 = vmatprep.mubr.bf16.mxu0 0
    %633 = vmatmul.mubr.bf16.gmra.mrb[0].mxu0 %v528
    %v634 = vpop.f32.mrb[0].mxu0
    %v635 = vadd.f32 %v550, %v634
    %v636 = vpop.f32.mrb[0].mxu0
    %v637 = vpop.f32.mrb[0].mxu0
    %v638 = vpop.f32.mrb[0].mxu0
    %639 = vdwg.mxu0
    %640 = vst [vmem:[#allocation8] sm:$0xff] %v635
    // Predicated region
    $region42: #{_jit_forward.1} parent=1 // pred_check
      _
    $region43: #{_jit_forward.1} parent=1 // pred_check_branch
      %642 = sbr.rel (0) target = $region45
    $region44: #{_jit_forward.1} parent=1 // pred_region
      %s644 = ssub.s32 128, 128
      %645 = vsyncadd [#allocation4], %s644
      %s647 = sshll.u32 [#allocation8], 4
      %s648 = int_to_ptr.vmem [resolvable:$true] %s647
      %650 = dma.vmem_to_hbm [thread:$0]  %s648, 128, %s7, [#allocation4]
    $region45: #{_jit_forward.1} parent=1 // pred_fallthru
      _
    // Predicated region
    $region46: #{_jit_forward.1} parent=1 // pred_check
      _
    $region47: #{_jit_forward.1} parent=1 // pred_check_branch
      %652 = sbr.rel (0) target = $region49
    $region48: #{_jit_forward.1} parent=1 // pred_region
      _
    $region49: #{_jit_forward.1} parent=1 // pred_fallthru
      _
    // Predicated region
    $region50: #{_jit_forward.1} parent=1 // pred_check
      _
    $region51: #{_jit_forward.1} parent=1 // pred_check_branch
      %654 = sbr.rel (0) target = $region53
    $region52: #{_jit_forward.1} parent=1 // pred_region
      %655 = dma.done [#allocation4], 128
    $region53: #{_jit_forward.1} parent=1 // pred_fallthru
      _
    // Predicated region
    $region54: #{_jit_forward.1} parent=1 // pred_check
      _
    $region55: #{_jit_forward.1} parent=1 // pred_check_branch
      %657 = sbr.rel (0) target = $region57
    $region56: #{_jit_forward.1} parent=1 // pred_region
      _
    $region57: #{_jit_forward.1} parent=1 // pred_fallthru
      _
    %658 = vsyncpa [#allocation3], 1
    %659 = vsyncpa [#allocation6], 1
    %660 = vsyncpa [#allocation4], 1

</llo_original>
